<compile_context>
chip_gen: v6e
topology: v6e:2x2x1
jax: 0.10.0
libtpu: 0.0.40
codegen_flags: <defaults>
</compile_context>

<pallas_src>
import functools

import jax
import jax.numpy as jnp
import numpy as np
from jax.experimental import pallas as pl
from jax.experimental.pallas import tpu as pltpu

EPS = 1e-5


def _linear_bn_relu_kernel(x_ref, wt_ref, gamma_ref, beta_ref, o_ref, *, C, inv_n):
    # x_ref:     (R, INF)   with R = B*C; row r belongs to channel r % C
    # wt_ref:    (INF, OUTF) shared W.T
    # gamma_ref: (CP, 1)    per-channel BN weight, channel axis padded to sublane mult.
    # beta_ref:  (CP, 1)    per-channel BN bias (padded)
    # o_ref:     (R, OUTF)
    R = x_ref.shape[0]
    OUTF = wt_ref.shape[1]
    CP = gamma_ref.shape[0]

    # Shared-weight Linear: one MXU matmul over all batch*channel rows.
    h = jnp.dot(x_ref[...], wt_ref[...], preferred_element_type=jnp.float32)   # (R, OUTF)

    # One-hot channel-selection matrices, built on the VPU (no HBM traffic).
    r_cr = jax.lax.broadcasted_iota(jnp.int32, (CP, R), 1)
    c_cr = jax.lax.broadcasted_iota(jnp.int32, (CP, R), 0)
    r_rc = jax.lax.broadcasted_iota(jnp.int32, (R, CP), 0)
    c_rc = jax.lax.broadcasted_iota(jnp.int32, (R, CP), 1)
    if C & (C - 1) == 0:                                   # static Python branch
        ch_cr, ch_rc = r_cr & (C - 1), r_rc & (C - 1)
    else:
        ch_cr, ch_rc = r_cr % C, r_rc % C
    onehot_cr = jnp.where(ch_cr == c_cr, 1.0, 0.0).astype(jnp.float32)   # (CP, R)
    onehot_rc = jnp.where(ch_rc == c_rc, 1.0, 0.0).astype(jnp.float32)   # (R, CP)

    ones_row = jnp.ones((1, OUTF), jnp.float32)

    # Per-channel mean: MXU segment-sum + tiny lane reduction.
    seg_sum = jnp.dot(onehot_cr, h, preferred_element_type=jnp.float32)        # (CP, OUTF)
    mean_c = jnp.sum(seg_sum, axis=1, keepdims=True) * inv_n                   # (CP, 1)

    # Centered second pass for the (biased) variance.
    mean_rows = jnp.dot(onehot_rc, mean_c * ones_row,
                        preferred_element_type=jnp.float32)                    # (R, OUTF)
    d = h - mean_rows
    seg_sq = jnp.dot(onehot_cr, d * d, preferred_element_type=jnp.float32)     # (CP, OUTF)
    var_c = jnp.sum(seg_sq, axis=1, keepdims=True) * inv_n                     # (CP, 1)

    # Per-channel affine, expanded back to rows with two more tiny MXU matmuls
    # (no serial where-chain, padded channels select no rows so they are inert).
    scale_c = gamma_ref[...] * jax.lax.rsqrt(var_c + EPS)                      # (CP, 1)
    scale_rows = jnp.dot(onehot_rc, scale_c * ones_row,
                         preferred_element_type=jnp.float32)                   # (R, OUTF)
    beta_rows = jnp.dot(onehot_rc, beta_ref[...] * ones_row,
                        preferred_element_type=jnp.float32)                    # (R, OUTF)

    # BN affine + ReLU, single contiguous store.
    o_ref[...] = jnp.maximum(d * scale_rows + beta_rows, 0.0).astype(o_ref.dtype)


@jax.jit
def linear_bn_relu(x, weight, gamma, beta):
    """x: (B, C, INF), weight: (OUTF, INF), gamma/beta: (C,) -> (B, C, OUTF)."""
    B, C, INF = x.shape
    OUTF = weight.shape[0]
    R = B * C
    CP = ((C + 7) // 8) * 8        # pad channel axis to a sublane multiple for the MXU

    x_rows = x.reshape(R, INF)                              # contiguous -> free reshape
    w_t = weight.T.astype(x.dtype)                          # (INF, OUTF), tiny
    gamma_col = jnp.ones((CP, 1), jnp.float32).at[:C, :].set(
        gamma.reshape(C, 1).astype(jnp.float32))
    beta_col = jnp.zeros((CP, 1), jnp.float32).at[:C, :].set(
        beta.reshape(C, 1).astype(jnp.float32))

    kernel = functools.partial(_linear_bn_relu_kernel, C=C, inv_n=1.0 / (B * OUTF))

    out_rows = pl.pallas_call(
        kernel,
        out_shape=jax.ShapeDtypeStruct((R, OUTF), x.dtype),
        # No grid: nothing to pipeline -> whole arrays resident in VMEM, no double
        # buffers, no pipeline prologue/epilogue steps.
        in_specs=[
            pl.BlockSpec(memory_space=pltpu.MemorySpace.VMEM),
            pl.BlockSpec(memory_space=pltpu.MemorySpace.VMEM),
            pl.BlockSpec(memory_space=pltpu.MemorySpace.VMEM),
            pl.BlockSpec(memory_space=pltpu.MemorySpace.VMEM),
        ],
        out_specs=pl.BlockSpec(memory_space=pltpu.MemorySpace.VMEM),
        cost_estimate=pl.CostEstimate(
            flops=2 * R * INF * OUTF + 10 * R * CP * OUTF,
            transcendentals=CP,
            bytes_accessed=4 * (R * INF + INF * OUTF + 2 * CP + R * OUTF),
        ),
    )(x_rows, w_t, gamma_col, beta_col)

    return out_rows.reshape(B, C, OUTF)                     # contiguous -> free reshape


def reference(x, weight, gamma, beta, eps=EPS):
    """float64 numpy reference (exact semantics of Linear -> BatchNorm1d -> ReLU)."""
    x = np.asarray(x, np.float64)
    w = np.asarray(weight, np.float64)
    g = np.asarray(gamma, np.float64)
    b = np.asarray(beta, np.float64)
    h = np.einsum("bcf,of->bco", x, w)
    mean = h.mean(axis=(0, 2), keepdims=True)
    var = h.var(axis=(0, 2), keepdims=True)                  # biased, like BN batch stats
    y = g[None, :, None] * (h - mean) / np.sqrt(var + eps) + b[None, :, None]
    return np.maximum(y, 0.0)


if __name__ == "__main__":
    # Module config: Linear(inf=32, outf=32, outc=4, act='relu', bn=True, bias=False)
    B, C, INF, OUTF = 8, 4, 32, 32

    key = jax.random.PRNGKey(0)
    kx, kw = jax.random.split(key)

    x = jax.random.normal(kx, (B, C, INF), dtype=jnp.float32)
    bound = 1.0 / np.sqrt(INF)                               # nn.Linear default init range
    weight = jax.random.uniform(kw, (OUTF, INF), jnp.float32, -bound, bound)
    gamma = jnp.ones((C,), jnp.float32)                      # BatchNorm1d default weight
    beta = jnp.zeros((C,), jnp.float32)                      # BatchNorm1d default bias

    out = jax.block_until_ready(linear_bn_relu(x, weight, gamma, beta))

    ref = reference(x, weight, gamma, beta)
    np.testing.assert_allclose(np.asarray(out), ref, rtol=1e-4, atol=1e-4)
    print("KERNEL_OK")
</pallas_src>

<mosaic_0001>
module attributes {stable_mosaic.version = 11 : i64} {
  func.func @_linear_bn_relu_kernel(%arg0: memref<32x32xf32, #tpu.memory_space<vmem>>, %arg1: memref<32x32xf32, #tpu.memory_space<vmem>>, %arg2: memref<8x1xf32, #tpu.memory_space<vmem>>, %arg3: memref<8x1xf32, #tpu.memory_space<vmem>>, %arg4: memref<32x32xf32, #tpu.memory_space<vmem>>) attributes {dimension_semantics = [], scalar_prefetch = 0 : i64, scratch_operands = 0 : i64, tpu.core_type = #tpu.core_type<tc>} {
    %c0 = arith.constant 0 : index
    %c0_0 = arith.constant 0 : index
    %0 = vector.load %arg0[%c0, %c0_0] : memref<32x32xf32, #tpu.memory_space<vmem>>, vector<32x32xf32>
    %c0_1 = arith.constant 0 : index
    %c0_2 = arith.constant 0 : index
    %1 = vector.load %arg1[%c0_1, %c0_2] : memref<32x32xf32, #tpu.memory_space<vmem>>, vector<32x32xf32>
    %cst = arith.constant dense<0.000000e+00> : vector<32x32xf32>
    %2 = tpu.matmul %0, %1, %cst {dimension_numbers = #tpu.dot_dimension_numbers<[1], [0], [0], [1], [0, 0, 1, 1], [], []>} : vector<32x32xf32>, vector<32x32xf32>, vector<32x32xf32> -> vector<32x32xf32>
    %3 = tpu.iota {dimensions = array<i32: 1>} : vector<8x32xi32>
    %4 = tpu.iota {dimensions = array<i32: 0>} : vector<8x32xi32>
    %5 = tpu.iota {dimensions = array<i32: 0>} : vector<32x8xi32>
    %6 = tpu.iota {dimensions = array<i32: 1>} : vector<32x8xi32>
    %c3_i32 = arith.constant 3 : i32
    %7 = vector.broadcast %c3_i32 : i32 to vector<8x32xi32>
    %8 = arith.andi %3, %7 : vector<8x32xi32>
    %c3_i32_3 = arith.constant 3 : i32
    %9 = vector.broadcast %c3_i32_3 : i32 to vector<32x8xi32>
    %10 = arith.andi %5, %9 : vector<32x8xi32>
    %11 = arith.cmpi eq, %8, %4 : vector<8x32xi32>
    %cst_4 = arith.constant 1.000000e+00 : f32
    %cst_5 = arith.constant 0.000000e+00 : f32
    %12 = vector.broadcast %cst_4 : f32 to vector<8x32xf32>
    %13 = vector.broadcast %cst_5 : f32 to vector<8x32xf32>
    %14 = arith.select %11, %12, %13 : vector<8x32xi1>, vector<8x32xf32>
    %15 = arith.cmpi eq, %10, %6 : vector<32x8xi32>
    %cst_6 = arith.constant 1.000000e+00 : f32
    %cst_7 = arith.constant 0.000000e+00 : f32
    %16 = vector.broadcast %cst_6 : f32 to vector<32x8xf32>
    %17 = vector.broadcast %cst_7 : f32 to vector<32x8xf32>
    %18 = arith.select %15, %16, %17 : vector<32x8xi1>, vector<32x8xf32>
    %cst_8 = arith.constant 1.000000e+00 : f32
    %19 = vector.broadcast %cst_8 : f32 to vector<1x32xf32>
    %cst_9 = arith.constant dense<0.000000e+00> : vector<8x32xf32>
    %20 = tpu.matmul %14, %2, %cst_9 {dimension_numbers = #tpu.dot_dimension_numbers<[1], [0], [0], [1], [0, 0, 1, 1], [], []>} : vector<8x32xf32>, vector<32x32xf32>, vector<8x32xf32> -> vector<8x32xf32>
    %cst_10 = arith.constant dense<0.000000e+00> : vector<8xf32>
    %21 = vector.multi_reduction <add>, %20, %cst_10 [1] : vector<8x32xf32> to vector<8xf32>
    %22 = vector.shape_cast %21 : vector<8xf32> to vector<8x1xf32>
    %cst_11 = arith.constant 3.906250e-03 : f32
    %23 = vector.broadcast %cst_11 : f32 to vector<8x1xf32>
    %24 = arith.mulf %22, %23 : vector<8x1xf32>
    %25 = vector.broadcast %24 : vector<8x1xf32> to vector<8x32xf32>
    %26 = vector.broadcast %19 : vector<1x32xf32> to vector<8x32xf32>
    %27 = arith.mulf %25, %26 : vector<8x32xf32>
    %cst_12 = arith.constant dense<0.000000e+00> : vector<32x32xf32>
    %28 = tpu.matmul %18, %27, %cst_12 {dimension_numbers = #tpu.dot_dimension_numbers<[1], [0], [0], [1], [0, 0, 1, 1], [], []>} : vector<32x8xf32>, vector<8x32xf32>, vector<32x32xf32> -> vector<32x32xf32>
    %29 = arith.subf %2, %28 : vector<32x32xf32>
    %30 = arith.mulf %29, %29 : vector<32x32xf32>
    %cst_13 = arith.constant dense<0.000000e+00> : vector<8x32xf32>
    %31 = tpu.matmul %14, %30, %cst_13 {dimension_numbers = #tpu.dot_dimension_numbers<[1], [0], [0], [1], [0, 0, 1, 1], [], []>} : vector<8x32xf32>, vector<32x32xf32>, vector<8x32xf32> -> vector<8x32xf32>
    %cst_14 = arith.constant dense<0.000000e+00> : vector<8xf32>
    %32 = vector.multi_reduction <add>, %31, %cst_14 [1] : vector<8x32xf32> to vector<8xf32>
    %33 = vector.shape_cast %32 : vector<8xf32> to vector<8x1xf32>
    %cst_15 = arith.constant 3.906250e-03 : f32
    %34 = vector.broadcast %cst_15 : f32 to vector<8x1xf32>
    %35 = arith.mulf %33, %34 : vector<8x1xf32>
    %c0_16 = arith.constant 0 : index
    %c0_17 = arith.constant 0 : index
    %36 = vector.load %arg2[%c0_16, %c0_17] : memref<8x1xf32, #tpu.memory_space<vmem>>, vector<8x1xf32>
    %cst_18 = arith.constant 9.99999974E-6 : f32
    %37 = vector.broadcast %cst_18 : f32 to vector<8x1xf32>
    %38 = arith.addf %35, %37 : vector<8x1xf32>
    %39 = math.rsqrt %38 : vector<8x1xf32>
    %40 = arith.mulf %36, %39 : vector<8x1xf32>
    %41 = vector.broadcast %40 : vector<8x1xf32> to vector<8x32xf32>
    %42 = vector.broadcast %19 : vector<1x32xf32> to vector<8x32xf32>
    %43 = arith.mulf %41, %42 : vector<8x32xf32>
    %cst_19 = arith.constant dense<0.000000e+00> : vector<32x32xf32>
    %44 = tpu.matmul %18, %43, %cst_19 {dimension_numbers = #tpu.dot_dimension_numbers<[1], [0], [0], [1], [0, 0, 1, 1], [], []>} : vector<32x8xf32>, vector<8x32xf32>, vector<32x32xf32> -> vector<32x32xf32>
    %c0_20 = arith.constant 0 : index
    %c0_21 = arith.constant 0 : index
    %45 = vector.load %arg3[%c0_20, %c0_21] : memref<8x1xf32, #tpu.memory_space<vmem>>, vector<8x1xf32>
    %46 = vector.broadcast %45 : vector<8x1xf32> to vector<8x32xf32>
    %47 = vector.broadcast %19 : vector<1x32xf32> to vector<8x32xf32>
    %48 = arith.mulf %46, %47 : vector<8x32xf32>
    %cst_22 = arith.constant dense<0.000000e+00> : vector<32x32xf32>
    %49 = tpu.matmul %18, %48, %cst_22 {dimension_numbers = #tpu.dot_dimension_numbers<[1], [0], [0], [1], [0, 0, 1, 1], [], []>} : vector<32x8xf32>, vector<8x32xf32>, vector<32x32xf32> -> vector<32x32xf32>
    %50 = arith.mulf %29, %44 : vector<32x32xf32>
    %51 = arith.addf %50, %49 : vector<32x32xf32>
    %cst_23 = arith.constant 0.000000e+00 : f32
    %52 = vector.broadcast %cst_23 : f32 to vector<32x32xf32>
    %53 = arith.maximumf %51, %52 : vector<32x32xf32>
    %c0_24 = arith.constant 0 : index
    %c0_25 = arith.constant 0 : index
    %54 = vector.load %arg4[%c0_24, %c0_25] : memref<32x32xf32, #tpu.memory_space<vmem>>, vector<32x32xf32>
    tpu.vector_store %arg4[%c0_24, %c0_25], %53 {strides = array<i32>} : memref<32x32xf32, #tpu.memory_space<vmem>>, vector<32x32xf32>,
    return
  }
}

</mosaic_0001>

<llo_original>
// kernel: linear_bn_relu.1
$region0: #{linear_bn_relu.1}
  #allocation0 [shape = 'u32[]', space=smem, size = 0x4, offset = 0x4, fixed_abs, tag = 'smem constant byte address 0x4 - core index']
  #allocation1 [shape = 'u32[144,128]{1,0:T(1,128)}', space=vmem, size = 0x12000, scoped, tag = 'internal scratch']
  %s0 = inlined_call_operand.vmem [shape: f32[32,32], index: 0, kind: input, shape index: {}]
  %s1 = inlined_call_operand.vmem [shape: f32[32,32], index: 1, kind: input, shape index: {}]
  %s2 = inlined_call_operand.vmem [shape: f32[8,1], index: 2, kind: input, shape index: {}]
  %s3 = inlined_call_operand.vmem [shape: f32[8,1], index: 3, kind: input, shape index: {}]
  %s4 = inlined_call_operand.hbm [shape: f32[32,32], index: 4, kind: output, shape index: {}]
  %s5 = sld [smem:[#allocation0]]
  $region26: #{linear_bn_relu.1} parent=0
    _
  %s7 = ssub.s32 1, %s5
  %s8 = scalar_select 0, %s7, %s5
  $region1: #{linear_bn_relu.1} parent=0
    #allocation2 [shape = 'u8[16384]{0}', space=vmem, size = 0x4000, scoped, tag = 'output window, operand 0, single buffered']
    #allocation3 [shape = 's32[1]{0}', space=sflag, size = 0x4, scoped, tag = 'scoped memory for linear_bn_relu.1']
    %9 = vsyncpa [#allocation3], 0
    // Predicated region
    $region2: #{linear_bn_relu.1} parent=1 // pred_check
      _
    $region3: #{linear_bn_relu.1} parent=1 // pred_check_branch
      %11 = sbr.rel (0) target = $region5
    $region4: #{linear_bn_relu.1} parent=1 // pred_region
      _
    $region5: #{linear_bn_relu.1} parent=1 // pred_fallthru
      _
    // Predicated region
    $region6: #{linear_bn_relu.1} parent=1 // pred_check
      _
    $region7: #{linear_bn_relu.1} parent=1 // pred_check_branch
      %13 = sbr.rel (0) target = $region9
    $region8: #{linear_bn_relu.1} parent=1 // pred_region
      _
    $region9: #{linear_bn_relu.1} parent=1 // pred_fallthru
      _
    // Predicated region
    $region10: #{linear_bn_relu.1} parent=1 // pred_check
      _
    $region11: #{linear_bn_relu.1} parent=1 // pred_check_branch
      %15 = sbr.rel (0) target = $region13
    $region12: #{linear_bn_relu.1} parent=1 // pred_region
      _
    $region13: #{linear_bn_relu.1} parent=1 // pred_fallthru
      _
    // Predicated region
    $region14: #{linear_bn_relu.1} parent=1 // pred_check
      _
    $region15: #{linear_bn_relu.1} parent=1 // pred_check_branch
      %17 = sbr.rel (0) target = $region17
    $region16: #{linear_bn_relu.1} parent=1 // pred_region
      _
    $region17: #{linear_bn_relu.1} parent=1 // pred_fallthru
      _
    %v18 = vld [vmem:[%s0] sm:$0xff]
    %v19 = vld [vmem:[%s0 + $0x8] sm:$0xff]
    %v20 = vld [vmem:[%s0 + $0x10] sm:$0xff]
    %v21 = vld [vmem:[%s0 + $0x18] sm:$0xff]
    %v22 = vld [vmem:[%s1] sm:$0xff]
    %v23 = vld [vmem:[%s1 + $0x8] sm:$0xff]
    %v24 = vld [vmem:[%s1 + $0x10] sm:$0xff]
    %v25 = vld [vmem:[%s1 + $0x18] sm:$0xff]
    %vm26 = vcmask 261120
    %v28 = vsel %vm26, %v18, 0
    %v31 = vsel %vm26, %v19, 0
    %v34 = vsel %vm26, %v20, 0
    %v37 = vsel %vm26, %v21, 0
    %39 = vmatprep.subr.mxu0 0.0
    %40 = vmatpush1.msra.mxu0 0.0
    %41 = vmatprep.subr.mxu0 0.0
    %42 = vmatpush1.msra.mxu0 0.0
    %43 = vmatprep.subr.mxu0 0.0
    %44 = vmatpush1.msra.mxu0 0.0
    %45 = vmatprep.subr.mxu0 0.0
    %46 = vmatpush1.msra.mxu0 0.0
    %47 = vmatprep.subr.mxu0 0.0
    %48 = vmatpush1.msra.mxu0 0.0
    %49 = vmatprep.subr.mxu0 0.0
    %50 = vmatpush1.msra.mxu0 0.0
    %51 = vmatprep.subr.mxu0 0.0
    %52 = vmatpush1.msra.mxu0 0.0
    %53 = vmatprep.subr.mxu0 0.0
    %54 = vmatpush1.msra.mxu0 0.0
    %55 = vmatprep.subr.mxu0 0.0
    %56 = vmatpush1.msra.mxu0 0.0
    %57 = vmatprep.subr.mxu0 0.0
    %58 = vmatpush1.msra.mxu0 0.0
    %59 = vmatprep.subr.mxu0 0.0
    %60 = vmatpush1.msra.mxu0 0.0
    %61 = vmatprep.subr.mxu0 0.0
    %62 = vmatpush1.msra.mxu0 0.0
    %63 = vmatprep.subr.mxu0 0.0
    %64 = vmatpush1.msra.mxu0 %v25
    %65 = vmatprep.subr.mxu0 0.0
    %66 = vmatpush1.msra.mxu0 %v24
    %67 = vmatprep.subr.mxu0 0.0
    %68 = vmatpush1.msra.mxu0 %v23
    %69 = vmatprep.subr.mxu0 0.0
    %70 = vmatpush1.msra.mxu0 %v22
    %71 = vmatprep.subr.mxu0 0.0
    %72 = vmatpush2.msra.mxu0 0.0
    %73 = vmatprep.subr.mxu0 0.0
    %74 = vmatpush2.msra.mxu0 0.0
    %75 = vmatprep.subr.mxu0 0.0
    %76 = vmatpush2.msra.mxu0 0.0
    %77 = vmatprep.subr.mxu0 0.0
    %78 = vmatpush2.msra.mxu0 0.0
    %79 = vmatprep.subr.mxu0 0.0
    %80 = vmatpush2.msra.mxu0 0.0
    %81 = vmatprep.subr.mxu0 0.0
    %82 = vmatpush2.msra.mxu0 0.0
    %83 = vmatprep.subr.mxu0 0.0
    %84 = vmatpush2.msra.mxu0 0.0
    %85 = vmatprep.subr.mxu0 0.0
    %86 = vmatpush2.msra.mxu0 0.0
    %87 = vmatprep.subr.mxu0 0.0
    %88 = vmatpush2.msra.mxu0 0.0
    %89 = vmatprep.subr.mxu0 0.0
    %90 = vmatpush2.msra.mxu0 0.0
    %91 = vmatprep.subr.mxu0 0.0
    %92 = vmatpush2.msra.mxu0 0.0
    %93 = vmatprep.subr.mxu0 0.0
    %94 = vmatpush2.msra.mxu0 0.0
    %95 = vmatprep.subr.mxu0 0.0
    %96 = vmatpush2.msra.mxu0 0.0
    %97 = vmatprep.subr.mxu0 0.0
    %98 = vmatpush2.msra.mxu0 0.0
    %99 = vmatprep.subr.mxu0 0.0
    %100 = vmatpush2.msra.mxu0 0.0
    %101 = vmatprep.subr.mxu0 0.0
    %102 = vmatpush2.msra.mxu0 0.0
    %103 = vmatprep.mubr.f32.mxu0 0.0
    %104 = vmatmul.mubr.f32.gmra.mxu0 %v28
    %v105 = vpop.f32.mrf.mxu0
    %v106 = vadd.f32 0.0, %v105
    %v107 = vpop.f32.mrf.mxu0
    %108 = vmatprep.mubr.f32.mxu0 0.0
    %109 = vmatmul.mubr.f32.gmra.mxu0 %v31
    %v110 = vpop.f32.mrf.mxu0
    %v111 = vadd.f32 0.0, %v110
    %v112 = vpop.f32.mrf.mxu0
    %113 = vmatprep.mubr.f32.mxu0 0.0
    %114 = vmatmul.mubr.f32.gmra.mxu0 %v34
    %v115 = vpop.f32.mrf.mxu0
    %v116 = vadd.f32 0.0, %v115
    %v117 = vpop.f32.mrf.mxu0
    %118 = vmatprep.mubr.f32.mxu0 0.0
    %119 = vmatmul.mubr.f32.gmra.mxu0 %v37
    %v120 = vpop.f32.mrf.mxu0
    %v121 = vadd.f32 0.0, %v120
    %v122 = vpop.f32.mrf.mxu0
    %123 = vdwg.mxu0
    %v124 = vlaneseq
    %v125 = vand.u32 %v124, 127
    %v126 = vlaneseq
    %v127 = vshrl.u32 %v126, 7
    %v128 = vadd.s32 %v127, 8
    %v129 = vadd.s32 %v127, 16
    %v130 = vadd.s32 %v127, 24
    %v131 = vand.u32 %v125, 3
    %v132 = vand.u32 %v127, 3
    %v133 = vand.u32 %v128, 3
    %v134 = vand.u32 %v129, 3
    %v135 = vand.u32 %v130, 3
    %vm136 = vcmp.eq.s32.totalorder %v131, %v127
    %v137 = vsel %vm136, 1.0, 0.0
    %vm138 = vcmp.eq.s32.totalorder %v132, %v125
    %vm139 = vcmp.eq.s32.totalorder %v133, %v125
    %vm140 = vcmp.eq.s32.totalorder %v134, %v125
    %vm141 = vcmp.eq.s32.totalorder %v135, %v125
    %v142 = vsel %vm138, 1.0, 0.0
    %v143 = vsel %vm139, 1.0, 0.0
    %v144 = vsel %vm140, 1.0, 0.0
    %v145 = vsel %vm141, 1.0, 0.0
    %v147 = vsel %vm26, %v137, 0
    %149 = vmatprep.subr.mxu0 0.0
    %150 = vmatpush1.msra.mxu0 0.0
    %151 = vmatprep.subr.mxu0 0.0
    %152 = vmatpush1.msra.mxu0 0.0
    %153 = vmatprep.subr.mxu0 0.0
    %154 = vmatpush1.msra.mxu0 0.0
    %155 = vmatprep.subr.mxu0 0.0
    %156 = vmatpush1.msra.mxu0 0.0
    %157 = vmatprep.subr.mxu0 0.0
    %158 = vmatpush1.msra.mxu0 0.0
    %159 = vmatprep.subr.mxu0 0.0
    %160 = vmatpush1.msra.mxu0 0.0
    %161 = vmatprep.subr.mxu0 0.0
    %162 = vmatpush1.msra.mxu0 0.0
    %163 = vmatprep.subr.mxu0 0.0
    %164 = vmatpush1.msra.mxu0 0.0
    %165 = vmatprep.subr.mxu0 0.0
    %166 = vmatpush1.msra.mxu0 0.0
    %167 = vmatprep.subr.mxu0 0.0
    %168 = vmatpush1.msra.mxu0 0.0
    %169 = vmatprep.subr.mxu0 0.0
    %170 = vmatpush1.msra.mxu0 0.0
    %171 = vmatprep.subr.mxu0 0.0
    %172 = vmatpush1.msra.mxu0 0.0
    %173 = vmatprep.subr.mxu0 0.0
    %174 = vmatpush1.msra.mxu0 %v121
    %175 = vmatprep.subr.mxu0 0.0
    %176 = vmatpush1.msra.mxu0 %v116
    %177 = vmatprep.subr.mxu0 0.0
    %178 = vmatpush1.msra.mxu0 %v111
    %179 = vmatprep.subr.mxu0 0.0
    %180 = vmatpush1.msra.mxu0 %v106
    %181 = vmatprep.subr.mxu0 0.0
    %182 = vmatpush2.msra.mxu0 0.0
    %183 = vmatprep.subr.mxu0 0.0
    %184 = vmatpush2.msra.mxu0 0.0
    %185 = vmatprep.subr.mxu0 0.0
    %186 = vmatpush2.msra.mxu0 0.0
    %187 = vmatprep.subr.mxu0 0.0
    %188 = vmatpush2.msra.mxu0 0.0
    %189 = vmatprep.subr.mxu0 0.0
    %190 = vmatpush2.msra.mxu0 0.0
    %191 = vmatprep.subr.mxu0 0.0
    %192 = vmatpush2.msra.mxu0 0.0
    %193 = vmatprep.subr.mxu0 0.0
    %194 = vmatpush2.msra.mxu0 0.0
    %195 = vmatprep.subr.mxu0 0.0
    %196 = vmatpush2.msra.mxu0 0.0
    %197 = vmatprep.subr.mxu0 0.0
    %198 = vmatpush2.msra.mxu0 0.0
    %199 = vmatprep.subr.mxu0 0.0
    %200 = vmatpush2.msra.mxu0 0.0
    %201 = vmatprep.subr.mxu0 0.0
    %202 = vmatpush2.msra.mxu0 0.0
    %203 = vmatprep.subr.mxu0 0.0
    %204 = vmatpush2.msra.mxu0 0.0
    %205 = vmatprep.subr.mxu0 0.0
    %206 = vmatpush2.msra.mxu0 0.0
    %207 = vmatprep.subr.mxu0 0.0
    %208 = vmatpush2.msra.mxu0 0.0
    %209 = vmatprep.subr.mxu0 0.0
    %210 = vmatpush2.msra.mxu0 0.0
    %211 = vmatprep.subr.mxu0 0.0
    %212 = vmatpush2.msra.mxu0 0.0
    %213 = vmatprep.mubr.f32.mxu0 0.0
    %214 = vmatmul.mubr.f32.gmra.mxu0 %v147
    %v215 = vpop.f32.mrf.mxu0
    %v216 = vadd.f32 0.0, %v215
    %v217 = vpop.f32.mrf.mxu0
    %218 = vdwg.mxu0
    %v219 = vsel %vm26, %v216, 0.0
    %220 = vadd.xlane.f32.xlu0 %v219
    %v221 = vpop.xlane.xlu0 %220
    %v222 = vmul.f32 %v221, 0.00390625
    %vm223 = vcmask 64512
    %v225 = vsel %vm223, %v142, 0
    %v228 = vsel %vm223, %v143, 0
    %v231 = vsel %vm223, %v144, 0
    %v234 = vsel %vm223, %v145, 0
    %236 = vmatprep.subr.mxu0 0.0
    %237 = vmatpush1.msra.mxu0 0.0
    %238 = vmatprep.subr.mxu0 0.0
    %239 = vmatpush1.msra.mxu0 0.0
    %240 = vmatprep.subr.mxu0 0.0
    %241 = vmatpush1.msra.mxu0 0.0
    %242 = vmatprep.subr.mxu0 0.0
    %243 = vmatpush1.msra.mxu0 0.0
    %244 = vmatprep.subr.mxu0 0.0
    %245 = vmatpush1.msra.mxu0 0.0
    %246 = vmatprep.subr.mxu0 0.0
    %247 = vmatpush1.msra.mxu0 0.0
    %248 = vmatprep.subr.mxu0 0.0
    %249 = vmatpush1.msra.mxu0 0.0
    %250 = vmatprep.subr.mxu0 0.0
    %251 = vmatpush1.msra.mxu0 0.0
    %252 = vmatprep.subr.mxu0 0.0
    %253 = vmatpush1.msra.mxu0 0.0
    %254 = vmatprep.subr.mxu0 0.0
    %255 = vmatpush1.msra.mxu0 0.0
    %256 = vmatprep.subr.mxu0 0.0
    %257 = vmatpush1.msra.mxu0 0.0
    %258 = vmatprep.subr.mxu0 0.0
    %259 = vmatpush1.msra.mxu0 0.0
    %260 = vmatprep.subr.mxu0 0.0
    %261 = vmatpush1.msra.mxu0 0.0
    %262 = vmatprep.subr.mxu0 0.0
    %263 = vmatpush1.msra.mxu0 0.0
    %264 = vmatprep.subr.mxu0 0.0
    %265 = vmatpush1.msra.mxu0 0.0
    %266 = vmatprep.subr.mxu0 0.0
    %267 = vmatpush1.msra.mxu0 %v222
    %268 = vmatprep.subr.mxu0 0.0
    %269 = vmatpush2.msra.mxu0 0.0
    %270 = vmatprep.subr.mxu0 0.0
    %271 = vmatpush2.msra.mxu0 0.0
    %272 = vmatprep.subr.mxu0 0.0
    %273 = vmatpush2.msra.mxu0 0.0
    %274 = vmatprep.subr.mxu0 0.0
    %275 = vmatpush2.msra.mxu0 0.0
    %276 = vmatprep.subr.mxu0 0.0
    %277 = vmatpush2.msra.mxu0 0.0
    %278 = vmatprep.subr.mxu0 0.0
    %279 = vmatpush2.msra.mxu0 0.0
    %280 = vmatprep.subr.mxu0 0.0
    %281 = vmatpush2.msra.mxu0 0.0
    %282 = vmatprep.subr.mxu0 0.0
    %283 = vmatpush2.msra.mxu0 0.0
    %284 = vmatprep.subr.mxu0 0.0
    %285 = vmatpush2.msra.mxu0 0.0
    %286 = vmatprep.subr.mxu0 0.0
    %287 = vmatpush2.msra.mxu0 0.0
    %288 = vmatprep.subr.mxu0 0.0
    %289 = vmatpush2.msra.mxu0 0.0
    %290 = vmatprep.subr.mxu0 0.0
    %291 = vmatpush2.msra.mxu0 0.0
    %292 = vmatprep.subr.mxu0 0.0
    %293 = vmatpush2.msra.mxu0 0.0
    %294 = vmatprep.subr.mxu0 0.0
    %295 = vmatpush2.msra.mxu0 0.0
    %296 = vmatprep.subr.mxu0 0.0
    %297 = vmatpush2.msra.mxu0 0.0
    %298 = vmatprep.subr.mxu0 0.0
    %299 = vmatpush2.msra.mxu0 0.0
    %300 = vmatprep.mubr.f32.mxu0 0.0
    %301 = vmatmul.mubr.f32.gmra.mxu0 %v225
    %v302 = vpop.f32.mrf.mxu0
    %v303 = vadd.f32 0.0, %v302
    %v304 = vpop.f32.mrf.mxu0
    %305 = vmatprep.mubr.f32.mxu0 0.0
    %306 = vmatmul.mubr.f32.gmra.mxu0 %v228
    %v307 = vpop.f32.mrf.mxu0
    %v308 = vadd.f32 0.0, %v307
    %v309 = vpop.f32.mrf.mxu0
    %310 = vmatprep.mubr.f32.mxu0 0.0
    %311 = vmatmul.mubr.f32.gmra.mxu0 %v231
    %v312 = vpop.f32.mrf.mxu0
    %v313 = vadd.f32 0.0, %v312
    %v314 = vpop.f32.mrf.mxu0
    %315 = vmatprep.mubr.f32.mxu0 0.0
    %316 = vmatmul.mubr.f32.gmra.mxu0 %v234
    %v317 = vpop.f32.mrf.mxu0
    %v318 = vadd.f32 0.0, %v317
    %v319 = vpop.f32.mrf.mxu0
    %320 = vdwg.mxu0
    %v321 = vsub.f32 %v106, %v303
    %v322 = vsub.f32 %v111, %v308
    %v323 = vsub.f32 %v116, %v313
    %v324 = vsub.f32 %v121, %v318
    %v325 = vmul.f32 %v321, %v321
    %v326 = vmul.f32 %v322, %v322
    %v327 = vmul.f32 %v323, %v323
    %v328 = vmul.f32 %v324, %v324
    %329 = vmatprep.subr.mxu0 0.0
    %330 = vmatpush1.msra.mxu0 0.0
    %331 = vmatprep.subr.mxu0 0.0
    %332 = vmatpush1.msra.mxu0 0.0
    %333 = vmatprep.subr.mxu0 0.0
    %334 = vmatpush1.msra.mxu0 0.0
    %335 = vmatprep.subr.mxu0 0.0
    %336 = vmatpush1.msra.mxu0 0.0
    %337 = vmatprep.subr.mxu0 0.0
    %338 = vmatpush1.msra.mxu0 0.0
    %339 = vmatprep.subr.mxu0 0.0
    %340 = vmatpush1.msra.mxu0 0.0
    %341 = vmatprep.subr.mxu0 0.0
    %342 = vmatpush1.msra.mxu0 0.0
    %343 = vmatprep.subr.mxu0 0.0
    %344 = vmatpush1.msra.mxu0 0.0
    %345 = vmatprep.subr.mxu0 0.0
    %346 = vmatpush1.msra.mxu0 0.0
    %347 = vmatprep.subr.mxu0 0.0
    %348 = vmatpush1.msra.mxu0 0.0
    %349 = vmatprep.subr.mxu0 0.0
    %350 = vmatpush1.msra.mxu0 0.0
    %351 = vmatprep.subr.mxu0 0.0
    %352 = vmatpush1.msra.mxu0 0.0
    %353 = vmatprep.subr.mxu0 0.0
    %354 = vmatpush1.msra.mxu0 %v328
    %355 = vmatprep.subr.mxu0 0.0
    %356 = vmatpush1.msra.mxu0 %v327
    %357 = vmatprep.subr.mxu0 0.0
    %358 = vmatpush1.msra.mxu0 %v326
    %359 = vmatprep.subr.mxu0 0.0
    %360 = vmatpush1.msra.mxu0 %v325
    %361 = vmatprep.subr.mxu0 0.0
    %362 = vmatpush2.msra.mxu0 0.0
    %363 = vmatprep.subr.mxu0 0.0
    %364 = vmatpush2.msra.mxu0 0.0
    %365 = vmatprep.subr.mxu0 0.0
    %366 = vmatpush2.msra.mxu0 0.0
    %367 = vmatprep.subr.mxu0 0.0
    %368 = vmatpush2.msra.mxu0 0.0
    %369 = vmatprep.subr.mxu0 0.0
    %370 = vmatpush2.msra.mxu0 0.0
    %371 = vmatprep.subr.mxu0 0.0
    %372 = vmatpush2.msra.mxu0 0.0
    %373 = vmatprep.subr.mxu0 0.0
    %374 = vmatpush2.msra.mxu0 0.0
    %375 = vmatprep.subr.mxu0 0.0
    %376 = vmatpush2.msra.mxu0 0.0
    %377 = vmatprep.subr.mxu0 0.0
    %378 = vmatpush2.msra.mxu0 0.0
    %379 = vmatprep.subr.mxu0 0.0
    %380 = vmatpush2.msra.mxu0 0.0
    %381 = vmatprep.subr.mxu0 0.0
    %382 = vmatpush2.msra.mxu0 0.0
    %383 = vmatprep.subr.mxu0 0.0
    %384 = vmatpush2.msra.mxu0 0.0
    %385 = vmatprep.subr.mxu0 0.0
    %386 = vmatpush2.msra.mxu0 0.0
    %387 = vmatprep.subr.mxu0 0.0
    %388 = vmatpush2.msra.mxu0 0.0
    %389 = vmatprep.subr.mxu0 0.0
    %390 = vmatpush2.msra.mxu0 0.0
    %391 = vmatprep.subr.mxu0 0.0
    %392 = vmatpush2.msra.mxu0 0.0
    %393 = vmatprep.mubr.f32.mxu0 0.0
    %394 = vmatmul.mubr.f32.gmra.mxu0 %v147
    %v395 = vpop.f32.mrf.mxu0
    %v396 = vadd.f32 0.0, %v395
    %v397 = vpop.f32.mrf.mxu0
    %398 = vdwg.mxu0
    %v399 = vsel %vm26, %v396, 0.0
    %400 = vadd.xlane.f32.xlu0 %v399
    %v401 = vpop.xlane.xlu0 %400
    %v402 = vmul.f32 %v401, 0.00390625
    %v403 = vld [vmem:[%s2] sm:$0xff]
    %v404 = vadd.f32 %v402, 1e-05
    %v405 = vrsqrt.pop %v404
    %v406 = vmul.f32 %v403, %v405
    %408 = vset.pattern.permute.xlu0 0
    %409 = vperm.xlu0 %408, %v406
    %v410 = vpop.permute.xlu0 %409
    %412 = vmatprep.subr.mxu0 0.0
    %413 = vmatpush1.msra.mxu0 0.0
    %414 = vmatprep.subr.mxu0 0.0
    %415 = vmatpush1.msra.mxu0 0.0
    %416 = vmatprep.subr.mxu0 0.0
    %417 = vmatpush1.msra.mxu0 0.0
    %418 = vmatprep.subr.mxu0 0.0
    %419 = vmatpush1.msra.mxu0 0.0
    %420 = vmatprep.subr.mxu0 0.0
    %421 = vmatpush1.msra.mxu0 0.0
    %422 = vmatprep.subr.mxu0 0.0
    %423 = vmatpush1.msra.mxu0 0.0
    %424 = vmatprep.subr.mxu0 0.0
    %425 = vmatpush1.msra.mxu0 0.0
    %426 = vmatprep.subr.mxu0 0.0
    %427 = vmatpush1.msra.mxu0 0.0
    %428 = vmatprep.subr.mxu0 0.0
    %429 = vmatpush1.msra.mxu0 0.0
    %430 = vmatprep.subr.mxu0 0.0
    %431 = vmatpush1.msra.mxu0 0.0
    %432 = vmatprep.subr.mxu0 0.0
    %433 = vmatpush1.msra.mxu0 0.0
    %434 = vmatprep.subr.mxu0 0.0
    %435 = vmatpush1.msra.mxu0 0.0
    %436 = vmatprep.subr.mxu0 0.0
    %437 = vmatpush1.msra.mxu0 0.0
    %438 = vmatprep.subr.mxu0 0.0
    %439 = vmatpush1.msra.mxu0 0.0
    %440 = vmatprep.subr.mxu0 0.0
    %441 = vmatpush1.msra.mxu0 0.0
    %442 = vmatprep.subr.mxu0 0.0
    %443 = vmatpush1.msra.mxu0 %v410
    %444 = vmatprep.subr.mxu0 0.0
    %445 = vmatpush2.msra.mxu0 0.0
    %446 = vmatprep.subr.mxu0 0.0
    %447 = vmatpush2.msra.mxu0 0.0
    %448 = vmatprep.subr.mxu0 0.0
    %449 = vmatpush2.msra.mxu0 0.0
    %450 = vmatprep.subr.mxu0 0.0
    %451 = vmatpush2.msra.mxu0 0.0
    %452 = vmatprep.subr.mxu0 0.0
    %453 = vmatpush2.msra.mxu0 0.0
    %454 = vmatprep.subr.mxu0 0.0
    %455 = vmatpush2.msra.mxu0 0.0
    %456 = vmatprep.subr.mxu0 0.0
    %457 = vmatpush2.msra.mxu0 0.0
    %458 = vmatprep.subr.mxu0 0.0
    %459 = vmatpush2.msra.mxu0 0.0
    %460 = vmatprep.subr.mxu0 0.0
    %461 = vmatpush2.msra.mxu0 0.0
    %462 = vmatprep.subr.mxu0 0.0
    %463 = vmatpush2.msra.mxu0 0.0
    %464 = vmatprep.subr.mxu0 0.0
    %465 = vmatpush2.msra.mxu0 0.0
    %466 = vmatprep.subr.mxu0 0.0
    %467 = vmatpush2.msra.mxu0 0.0
    %468 = vmatprep.subr.mxu0 0.0
    %469 = vmatpush2.msra.mxu0 0.0
    %470 = vmatprep.subr.mxu0 0.0
    %471 = vmatpush2.msra.mxu0 0.0
    %472 = vmatprep.subr.mxu0 0.0
    %473 = vmatpush2.msra.mxu0 0.0
    %474 = vmatprep.subr.mxu0 0.0
    %475 = vmatpush2.msra.mxu0 0.0
    %476 = vmatprep.mubr.f32.mxu0 0.0
    %477 = vmatmul.mubr.f32.gmra.mxu0 %v225
    %v478 = vpop.f32.mrf.mxu0
    %v479 = vadd.f32 0.0, %v478
    %v480 = vpop.f32.mrf.mxu0
    %481 = vmatprep.mubr.f32.mxu0 0.0
    %482 = vmatmul.mubr.f32.gmra.mxu0 %v228
    %v483 = vpop.f32.mrf.mxu0
    %v484 = vadd.f32 0.0, %v483
    %v485 = vpop.f32.mrf.mxu0
    %486 = vmatprep.mubr.f32.mxu0 0.0
    %487 = vmatmul.mubr.f32.gmra.mxu0 %v231
    %v488 = vpop.f32.mrf.mxu0
    %v489 = vadd.f32 0.0, %v488
    %v490 = vpop.f32.mrf.mxu0
    %491 = vmatprep.mubr.f32.mxu0 0.0
    %492 = vmatmul.mubr.f32.gmra.mxu0 %v234
    %v493 = vpop.f32.mrf.mxu0
    %v494 = vadd.f32 0.0, %v493
    %v495 = vpop.f32.mrf.mxu0
    %496 = vdwg.mxu0
    %v497 = vld [vmem:[%s3] sm:$0xff]
    %499 = vset.pattern.permute.xlu0 0
    %500 = vperm.xlu0 %499, %v497
    %v501 = vpop.permute.xlu0 %500
    %503 = vmatprep.subr.mxu0 0.0
    %504 = vmatpush1.msra.mxu0 0.0
    %505 = vmatprep.subr.mxu0 0.0
    %506 = vmatpush1.msra.mxu0 0.0
    %507 = vmatprep.subr.mxu0 0.0
    %508 = vmatpush1.msra.mxu0 0.0
    %509 = vmatprep.subr.mxu0 0.0
    %510 = vmatpush1.msra.mxu0 0.0
    %511 = vmatprep.subr.mxu0 0.0
    %512 = vmatpush1.msra.mxu0 0.0
    %513 = vmatprep.subr.mxu0 0.0
    %514 = vmatpush1.msra.mxu0 0.0
    %515 = vmatprep.subr.mxu0 0.0
    %516 = vmatpush1.msra.mxu0 0.0
    %517 = vmatprep.subr.mxu0 0.0
    %518 = vmatpush1.msra.mxu0 0.0
    %519 = vmatprep.subr.mxu0 0.0
    %520 = vmatpush1.msra.mxu0 0.0
    %521 = vmatprep.subr.mxu0 0.0
    %522 = vmatpush1.msra.mxu0 0.0
    %523 = vmatprep.subr.mxu0 0.0
    %524 = vmatpush1.msra.mxu0 0.0
    %525 = vmatprep.subr.mxu0 0.0
    %526 = vmatpush1.msra.mxu0 0.0
    %527 = vmatprep.subr.mxu0 0.0
    %528 = vmatpush1.msra.mxu0 0.0
    %529 = vmatprep.subr.mxu0 0.0
    %530 = vmatpush1.msra.mxu0 0.0
    %531 = vmatprep.subr.mxu0 0.0
    %532 = vmatpush1.msra.mxu0 0.0
    %533 = vmatprep.subr.mxu0 0.0
    %534 = vmatpush1.msra.mxu0 %v501
    %535 = vmatprep.subr.mxu0 0.0
    %536 = vmatpush2.msra.mxu0 0.0
    %537 = vmatprep.subr.mxu0 0.0
    %538 = vmatpush2.msra.mxu0 0.0
    %539 = vmatprep.subr.mxu0 0.0
    %540 = vmatpush2.msra.mxu0 0.0
    %541 = vmatprep.subr.mxu0 0.0
    %542 = vmatpush2.msra.mxu0 0.0
    %543 = vmatprep.subr.mxu0 0.0
    %544 = vmatpush2.msra.mxu0 0.0
    %545 = vmatprep.subr.mxu0 0.0
    %546 = vmatpush2.msra.mxu0 0.0
    %547 = vmatprep.subr.mxu0 0.0
    %548 = vmatpush2.msra.mxu0 0.0
    %549 = vmatprep.subr.mxu0 0.0
    %550 = vmatpush2.msra.mxu0 0.0
    %551 = vmatprep.subr.mxu0 0.0
    %552 = vmatpush2.msra.mxu0 0.0
    %553 = vmatprep.subr.mxu0 0.0
    %554 = vmatpush2.msra.mxu0 0.0
    %555 = vmatprep.subr.mxu0 0.0
    %556 = vmatpush2.msra.mxu0 0.0
    %557 = vmatprep.subr.mxu0 0.0
    %558 = vmatpush2.msra.mxu0 0.0
    %559 = vmatprep.subr.mxu0 0.0
    %560 = vmatpush2.msra.mxu0 0.0
    %561 = vmatprep.subr.mxu0 0.0
    %562 = vmatpush2.msra.mxu0 0.0
    %563 = vmatprep.subr.mxu0 0.0
    %564 = vmatpush2.msra.mxu0 0.0
    %565 = vmatprep.subr.mxu0 0.0
    %566 = vmatpush2.msra.mxu0 0.0
    %567 = vmatprep.mubr.f32.mxu0 0.0
    %568 = vmatmul.mubr.f32.gmra.mxu0 %v225
    %v569 = vpop.f32.mrf.mxu0
    %v570 = vadd.f32 0.0, %v569
    %v571 = vpop.f32.mrf.mxu0
    %572 = vmatprep.mubr.f32.mxu0 0.0
    %573 = vmatmul.mubr.f32.gmra.mxu0 %v228
    %v574 = vpop.f32.mrf.mxu0
    %v575 = vadd.f32 0.0, %v574
    %v576 = vpop.f32.mrf.mxu0
    %577 = vmatprep.mubr.f32.mxu0 0.0
    %578 = vmatmul.mubr.f32.gmra.mxu0 %v231
    %v579 = vpop.f32.mrf.mxu0
    %v580 = vadd.f32 0.0, %v579
    %v581 = vpop.f32.mrf.mxu0
    %582 = vmatprep.mubr.f32.mxu0 0.0
    %583 = vmatmul.mubr.f32.gmra.mxu0 %v234
    %v584 = vpop.f32.mrf.mxu0
    %v585 = vadd.f32 0.0, %v584
    %v586 = vpop.f32.mrf.mxu0
    %587 = vdwg.mxu0
    %v588 = vmul.f32 %v321, %v479
    %v589 = vmul.f32 %v322, %v484
    %v590 = vmul.f32 %v323, %v489
    %v591 = vmul.f32 %v324, %v494
    %v592 = vadd.f32 %v588, %v570
    %v593 = vadd.f32 %v589, %v575
    %v594 = vadd.f32 %v590, %v580
    %v595 = vadd.f32 %v591, %v585
    %v596 = vmax.f32 %v592, 0.0
    %v597 = vmax.f32 %v593, 0.0
    %v598 = vmax.f32 %v594, 0.0
    %v599 = vmax.f32 %v595, 0.0
    %600 = vst.msk [vmem:[#allocation2] sm:$0xff] %vm26, %v596
    %601 = vst.msk [vmem:[#allocation2 + $0x8] sm:$0xff] %vm26, %v597
    %602 = vst.msk [vmem:[#allocation2 + $0x10] sm:$0xff] %vm26, %v598
    %603 = vst.msk [vmem:[#allocation2 + $0x18] sm:$0xff] %vm26, %v599
    // Predicated region
    $region18: #{linear_bn_relu.1} parent=1 // pred_check
      _
    $region19: #{linear_bn_relu.1} parent=1 // pred_check_branch
      %605 = sbr.rel (0) target = $region21
    $region20: #{linear_bn_relu.1} parent=1 // pred_region
      %s607 = ssub.s32 512, 512
      %608 = vsyncadd [#allocation3], %s607
      %s609 = sshll.u32 [#allocation2], 4
      %s610 = int_to_ptr.vmem [resolvable:$true] %s609
      %615 = dma.vmem_to_hbm [thread:$0]  %s610, 512, %s4, [#allocation3], 128, 128, 8
    $region21: #{linear_bn_relu.1} parent=1 // pred_fallthru
      _
    // Predicated region
    $region22: #{linear_bn_relu.1} parent=1 // pred_check
      _
    $region23: #{linear_bn_relu.1} parent=1 // pred_check_branch
      %617 = sbr.rel (0) target = $region25
    $region24: #{linear_bn_relu.1} parent=1 // pred_region
      %618 = dma.done [#allocation3], 512
    $region25: #{linear_bn_relu.1} parent=1 // pred_fallthru
      _
    %619 = vsyncpa [#allocation3], 1

</llo_original>
